<compile_context>
chip_gen: v6e
topology: v6e:2x2x1
jax: 0.10.0
libtpu: 0.0.40
codegen_flags: <defaults>
</compile_context>

<pallas_src>
import jax
import jax.numpy as jnp
from jax import lax
from jax.experimental import pallas as pl
from jax.experimental.pallas import tpu as pltpu

IN_CH = 99
KSIZE = 50
STRIDE = 10
T_OUT = 72                               # conv output length (forced by Linear(72, 15))
L_IN = (T_OUT - 1) * STRIDE + KSIZE      # 760
N_SHIFT = KSIZE // STRIDE                # 5   (kernel = 5 chunks of 10)
M_ROWS = L_IN // STRIDE                  # 76  = T_OUT + N_SHIFT - 1
QDIM = IN_CH * STRIDE                    # 990
HID = 15
OUT = 50
BN_EPS = 1e-5
MAX_B_TILE = 32                          # per review: good for v7x/v6e/v5e VMEM


def hubert_kernel(x_ref, wc_ref, cb_ref, w12_ref, b12_ref, out_ref):
    # x_ref  : (b_tile, 76, 990) VMEM   xf[b, m, c*10+r] = h_n[b, c, m*10+r]
    # wc_ref : (b_tile, 5, 990)         wc[., s, c*10+r] = conv_w[c, s*10+r] (pre-tiled)
    # cb_ref : (1,) SMEM                conv bias
    # w12_ref: (72, 50)                 BN + Linear(72,15) + Linear(15,50) fused
    # b12_ref: (1, 50)
    # out_ref: (1, b_tile, 50)
    x = x_ref[...]
    wc = wc_ref[...]

    # Batched conv GEMM on the MXU ('bqd,bkd->bqk' pattern):
    #   p[b, s, m] = sum_{c,r} conv_w[c, s*10+r] * h_n[b, c, m*10+r]
    p = jnp.einsum("bsq,bmq->bsm", wc, x,
                   preferred_element_type=jnp.float32)        # (b_tile, 5, 76)

    # Diagonal-band sum: conv[b, t] = sum_s p[b, s, t+s], t in [0, 72).
    # 5 static lane slices + 4 adds (replaces the old per-sample unrolled loop).
    conv = p[:, 0, 0:T_OUT]
    for s in range(1, N_SHIFT):
        conv = conv + p[:, s, s:s + T_OUT]                    # (b_tile, 72)

    conv = jnp.maximum(conv + cb_ref[0], 0.0)                 # conv bias + ReLU
    # BatchNorm (eval) + both Linears are folded into w12/b12 on the host.
    out = jnp.dot(conv, w12_ref[...],
                  preferred_element_type=jnp.float32) + b12_ref[...]   # (b_tile, 50)
    out_ref[...] = out.astype(out_ref.dtype).reshape(out_ref.shape)


def hubert_dense_forward(x, params, *, b_tile=None):
    """x: (B, 99, 760) float32  ->  (B, 50) float32 (eval-mode forward)."""
    B = x.shape[0]
    assert x.shape == (B, IN_CH, L_IN), x.shape

    if b_tile is None:
        # Keep grid >= 2 whenever B >= 2 (v7x has 2 TensorCores) and cap the tile
        # so the double-buffered block fits VMEM on all generations; this also
        # minimizes batch padding (at most grid-1 rows).
        grid = max(pl.cdiv(B, MAX_B_TILE), 2 if B >= 2 else 1)
        b_tile = pl.cdiv(B, grid)
    else:
        b_tile = max(1, int(b_tile))
        grid = pl.cdiv(B, b_tile)
    Bp = grid * b_tile

    xp = x if Bp == B else jnp.pad(x, ((0, Bp - B), (0, 0), (0, 0)))
    # Single relayout pass (pad above fuses into it under jit):
    #   xf[b, m, c*10+r] = h_n[b, c, m*10+r]
    xf = (xp.reshape(Bp, IN_CH, M_ROWS, STRIDE)
            .transpose(0, 2, 1, 3)
            .reshape(Bp, M_ROWS, QDIM)
            .astype(jnp.float32))

    # Conv weight rearranged to (shift, c*10+r) and pre-tiled over the batch tile
    # so the kernel's batched GEMM needs no in-kernel broadcast.
    wc = (params["conv_w"].reshape(IN_CH, N_SHIFT, STRIDE)
          .transpose(1, 0, 2)
          .reshape(N_SHIFT, QDIM)
          .astype(jnp.float32))
    wcb = jnp.broadcast_to(wc[None], (b_tile, N_SHIFT, QDIM))
    conv_b = params["conv_b"].reshape(1).astype(jnp.float32)

    # Fold BatchNorm (eval, 1 channel) into Linear(72,15): exact since ReLU precedes BN.
    bn_scale = params["bn_gamma"][0] / jnp.sqrt(params["bn_var"][0] + BN_EPS)
    bn_shift = params["bn_beta"][0] - params["bn_mean"][0] * bn_scale
    w1f = params["w1"] * bn_scale                               # (72, 15)
    b1f = params["b1"] + bn_shift * jnp.sum(params["w1"], axis=0)
    # Fuse Linear(72,15) @ Linear(15,50) into one GEMM (Dropout = identity in eval).
    w12 = (w1f @ params["w2"]).astype(jnp.float32)              # (72, 50)
    b12 = (b1f @ params["w2"] + params["b2"]).reshape(1, OUT).astype(jnp.float32)

    out = pl.pallas_call(
        hubert_kernel,
        out_shape=jax.ShapeDtypeStruct((grid, b_tile, OUT), jnp.float32),
        grid=(grid,),
        in_specs=[
            pl.BlockSpec((b_tile, M_ROWS, QDIM), lambda i: (i, 0, 0)),   # xf tile
            pl.BlockSpec((b_tile, N_SHIFT, QDIM), lambda i: (0, 0, 0)),  # conv weight (resident)
            pl.BlockSpec(memory_space=pltpu.MemorySpace.SMEM),           # conv bias
            pl.BlockSpec((T_OUT, OUT), lambda i: (0, 0)),                # fused W12
            pl.BlockSpec((1, OUT), lambda i: (0, 0)),                    # fused B12
        ],
        out_specs=pl.BlockSpec((1, b_tile, OUT), lambda i: (i, 0, 0)),
        compiler_params=pltpu.CompilerParams(
            dimension_semantics=("parallel",),
            vmem_limit_bytes=40 * 1024 * 1024),
    )(xf, wcb, conv_b, w12, b12)
    return out.reshape(Bp, OUT)[:B]


def hubert_dense_ref(x, params):
    """Pure-JAX reference of the PyTorch forward (eval mode)."""
    B = x.shape[0]
    conv = lax.conv_general_dilated(
        x, params["conv_w"], window_strides=(STRIDE,), padding="VALID",
        dimension_numbers=("NCH", "OIH", "NCH"))                 # (B, 1, 72)
    conv = conv + params["conv_b"].reshape(1, 1, 1)
    conv = jnp.maximum(conv, 0.0)
    scale = params["bn_gamma"] / jnp.sqrt(params["bn_var"] + BN_EPS)
    conv = (conv - params["bn_mean"].reshape(1, 1, 1)) * scale.reshape(1, 1, 1) \
        + params["bn_beta"].reshape(1, 1, 1)
    flat = conv.reshape(B, T_OUT)                                # Flatten
    h1 = flat @ params["w1"] + params["b1"]                      # Linear(72, 15)
    return h1 @ params["w2"] + params["b2"]                      # Linear(15, 50)


def init_params(key):
    ks = jax.random.split(key, 10)
    return {
        # Conv1d weight (out=1, in=99, k=50), bias (1,)
        "conv_w": jax.random.normal(ks[0], (1, IN_CH, KSIZE), jnp.float32) * 0.02,
        "conv_b": jax.random.normal(ks[1], (1,), jnp.float32) * 0.02,
        # BatchNorm1d(1) affine params + running stats (eval mode)
        "bn_gamma": 1.0 + 0.1 * jax.random.normal(ks[2], (1,), jnp.float32),
        "bn_beta": 0.1 * jax.random.normal(ks[3], (1,), jnp.float32),
        "bn_mean": 0.1 * jax.random.normal(ks[4], (1,), jnp.float32),
        "bn_var": 1.0 + 0.1 * jnp.abs(jax.random.normal(ks[5], (1,), jnp.float32)),
        # Linear weights stored transposed (in, out) relative to torch (out, in)
        "w1": jax.random.normal(ks[6], (T_OUT, HID), jnp.float32) * 0.05,
        "b1": jax.random.normal(ks[7], (HID,), jnp.float32) * 0.05,
        "w2": jax.random.normal(ks[8], (HID, OUT), jnp.float32) * 0.05,
        "b2": jax.random.normal(ks[9], (OUT,), jnp.float32) * 0.05,
    }


if __name__ == "__main__":
    B = 2
    key = jax.random.PRNGKey(0)
    k_param, k_x = jax.random.split(key)
    params = init_params(k_param)
    x = jax.random.normal(k_x, (B, IN_CH, L_IN), jnp.float32)    # h_n: (2, 99, 760)

    fwd = jax.jit(hubert_dense_forward)                          # pad+relayout fuse under jit
    out = jax.block_until_ready(fwd(x, params))
    assert out.shape == (B, OUT), out.shape

    ref = hubert_dense_ref(x, params)
    max_err = float(jnp.max(jnp.abs(out - ref)))
    if max_err > 1e-3:
        raise AssertionError(f"mismatch vs reference: max abs err = {max_err}")
    print("KERNEL_OK")
</pallas_src>

<mosaic_0001>
module attributes {stable_mosaic.version = 11 : i64} {
  func.func @hubert_kernel(%arg0: i32, %arg1: memref<1x76x990xf32, #tpu.memory_space<vmem>>, %arg2: memref<1x5x990xf32, #tpu.memory_space<vmem>>, %arg3: memref<1xf32, #tpu.memory_space<smem>>, %arg4: memref<72x50xf32, #tpu.memory_space<vmem>>, %arg5: memref<1x50xf32, #tpu.memory_space<vmem>>, %arg6: memref<1x1x50xf32, #tpu.memory_space<vmem>>) attributes {dimension_semantics = [#tpu.dimension_semantics<parallel>], iteration_bounds = array<i64: 2>, scalar_prefetch = 0 : i64, scratch_operands = 0 : i64, tpu.core_type = #tpu.core_type<tc>, window_params = [{transform_indices = @transform_0, window_bounds = array<i64: 1, 76, 990>}, {pipeline_mode = #tpu.pipeline_mode<synchronous>, transform_indices = @transform_1, window_bounds = array<i64: 1, 5, 990>}, {transform_indices = @transform_2, window_bounds = array<i64: 1>}, {pipeline_mode = #tpu.pipeline_mode<synchronous>, transform_indices = @transform_3, window_bounds = array<i64: 72, 50>}, {pipeline_mode = #tpu.pipeline_mode<synchronous>, transform_indices = @transform_4, window_bounds = array<i64: 1, 50>}, {transform_indices = @transform_5, window_bounds = array<i64: 1, 1, 50>}]} {
    %c0 = arith.constant 0 : index
    %c0_0 = arith.constant 0 : index
    %c0_1 = arith.constant 0 : index
    %0 = vector.load %arg1[%c0, %c0_0, %c0_1] : memref<1x76x990xf32, #tpu.memory_space<vmem>>, vector<1x76x990xf32>
    %c0_2 = arith.constant 0 : index
    %c0_3 = arith.constant 0 : index
    %c0_4 = arith.constant 0 : index
    %1 = vector.load %arg2[%c0_2, %c0_3, %c0_4] : memref<1x5x990xf32, #tpu.memory_space<vmem>>, vector<1x5x990xf32>
    "tpu.trace_start"() <{level = 10 : i32, message = "bsq,bmq->bsm"}> : () -> ()
    %cst = arith.constant dense<0.000000e+00> : vector<1x5x76xf32>
    %2 = tpu.matmul %1, %0, %cst {dimension_numbers = #tpu.dot_dimension_numbers<[2], [2], [1], [1], [0, 0, 0, 1, 1, 1], [0], [0]>} : vector<1x5x990xf32>, vector<1x76x990xf32>, vector<1x5x76xf32> -> vector<1x5x76xf32>
    "tpu.trace_stop"() : () -> ()
    %3 = vector.extract_strided_slice %2 {offsets = [0, 0, 0], sizes = [1, 1, 72], strides = [1, 1, 1]} : vector<1x5x76xf32> to vector<1x1x72xf32>
    %4 = vector.shape_cast %3 : vector<1x1x72xf32> to vector<1x72xf32>
    %5 = vector.extract_strided_slice %2 {offsets = [0, 1, 1], sizes = [1, 1, 72], strides = [1, 1, 1]} : vector<1x5x76xf32> to vector<1x1x72xf32>
    %6 = vector.shape_cast %5 : vector<1x1x72xf32> to vector<1x72xf32>
    %7 = arith.addf %4, %6 : vector<1x72xf32>
    %8 = vector.extract_strided_slice %2 {offsets = [0, 2, 2], sizes = [1, 1, 72], strides = [1, 1, 1]} : vector<1x5x76xf32> to vector<1x1x72xf32>
    %9 = vector.shape_cast %8 : vector<1x1x72xf32> to vector<1x72xf32>
    %10 = arith.addf %7, %9 : vector<1x72xf32>
    %11 = vector.extract_strided_slice %2 {offsets = [0, 3, 3], sizes = [1, 1, 72], strides = [1, 1, 1]} : vector<1x5x76xf32> to vector<1x1x72xf32>
    %12 = vector.shape_cast %11 : vector<1x1x72xf32> to vector<1x72xf32>
    %13 = arith.addf %10, %12 : vector<1x72xf32>
    %14 = vector.extract_strided_slice %2 {offsets = [0, 4, 4], sizes = [1, 1, 72], strides = [1, 1, 1]} : vector<1x5x76xf32> to vector<1x1x72xf32>
    %15 = vector.shape_cast %14 : vector<1x1x72xf32> to vector<1x72xf32>
    %16 = arith.addf %13, %15 : vector<1x72xf32>
    %c0_5 = arith.constant 0 : index
    %17 = memref.load %arg3[%c0_5] : memref<1xf32, #tpu.memory_space<smem>>
    %18 = vector.broadcast %17 : f32 to vector<1x72xf32>
    %19 = arith.addf %16, %18 : vector<1x72xf32>
    %cst_6 = arith.constant 0.000000e+00 : f32
    %20 = vector.broadcast %cst_6 : f32 to vector<1x72xf32>
    %21 = arith.maximumf %19, %20 : vector<1x72xf32>
    %c0_7 = arith.constant 0 : index
    %c0_8 = arith.constant 0 : index
    %22 = vector.load %arg4[%c0_7, %c0_8] : memref<72x50xf32, #tpu.memory_space<vmem>>, vector<72x50xf32>
    %cst_9 = arith.constant dense<0.000000e+00> : vector<1x50xf32>
    %23 = tpu.matmul %21, %22, %cst_9 {dimension_numbers = #tpu.dot_dimension_numbers<[1], [0], [0], [1], [0, 0, 1, 1], [], []>} : vector<1x72xf32>, vector<72x50xf32>, vector<1x50xf32> -> vector<1x50xf32>
    %c0_10 = arith.constant 0 : index
    %c0_11 = arith.constant 0 : index
    %24 = vector.load %arg5[%c0_10, %c0_11] : memref<1x50xf32, #tpu.memory_space<vmem>>, vector<1x50xf32>
    %25 = arith.addf %23, %24 : vector<1x50xf32>
    %26 = vector.shape_cast %25 : vector<1x50xf32> to vector<1x1x50xf32>
    %c0_12 = arith.constant 0 : index
    %c0_13 = arith.constant 0 : index
    %c0_14 = arith.constant 0 : index
    %27 = vector.load %arg6[%c0_12, %c0_13, %c0_14] : memref<1x1x50xf32, #tpu.memory_space<vmem>>, vector<1x1x50xf32>
    tpu.vector_store %arg6[%c0_12, %c0_13, %c0_14], %26 {strides = array<i32>} : memref<1x1x50xf32, #tpu.memory_space<vmem>>, vector<1x1x50xf32>,
    return
  }
  func.func @transform_0(%arg0: i32) -> (i32, i32, i32) {
    %c0_i32 = arith.constant 0 : i32
    %c0_i32_0 = arith.constant 0 : i32
    %c0_i32_1 = arith.constant 0 : i32
    return %arg0, %c0_i32, %c0_i32_0 : i32, i32, i32
  }
  func.func @transform_1(%arg0: i32) -> (i32, i32, i32) {
    %c0_i32 = arith.constant 0 : i32
    %c0_i32_0 = arith.constant 0 : i32
    %c0_i32_1 = arith.constant 0 : i32
    %c0_i32_2 = arith.constant 0 : i32
    return %c0_i32, %c0_i32_0, %c0_i32_1 : i32, i32, i32
  }
  func.func @transform_2(%arg0: i32) -> i32 {
    %c0_i32 = arith.constant 0 : i32
    %c0_i32_0 = arith.constant 0 : i32
    return %c0_i32 : i32
  }
  func.func @transform_3(%arg0: i32) -> (i32, i32) {
    %c0_i32 = arith.constant 0 : i32
    %c0_i32_0 = arith.constant 0 : i32
    %c0_i32_1 = arith.constant 0 : i32
    return %c0_i32, %c0_i32_0 : i32, i32
  }
  func.func @transform_4(%arg0: i32) -> (i32, i32) {
    %c0_i32 = arith.constant 0 : i32
    %c0_i32_0 = arith.constant 0 : i32
    %c0_i32_1 = arith.constant 0 : i32
    return %c0_i32, %c0_i32_0 : i32, i32
  }
  func.func @transform_5(%arg0: i32) -> (i32, i32, i32) {
    %c0_i32 = arith.constant 0 : i32
    %c0_i32_0 = arith.constant 0 : i32
    %c0_i32_1 = arith.constant 0 : i32
    return %arg0, %c0_i32, %c0_i32_0 : i32, i32, i32
  }
}

</mosaic_0001>

<llo_original>
// kernel: hubert_dense_forward.1
$region0: #{hubert_dense_forward.1}
  #allocation0 [shape = 'u32[]', space=smem, size = 0x4, offset = 0x4, fixed_abs, tag = 'smem constant byte address 0x4 - core index']
  #allocation1 [shape = 'u32[144,128]{1,0:T(1,128)}', space=vmem, size = 0x12000, scoped, tag = 'internal scratch']
  #allocation2 [shape = 'f32[1]{0:T(128)S(6)}', space=smem, size = 0x200, scoped, tag = 'scoped memory for hubert_dense_forward.1']
  %s0 = inlined_call_operand.vmem [shape: f32[2,76,990], index: 0, kind: input, shape index: {}]
  %s1 = inlined_call_operand.vmem [shape: f32[1,5,990], index: 1, kind: input, shape index: {}]
  %s2 = inlined_call_operand.<no memory space> [shape: f32[1], index: 2, kind: input, shape index: {}]
  %s3 = inlined_call_operand.vmem [shape: f32[72,50], index: 3, kind: input, shape index: {}]
  %s4 = inlined_call_operand.vmem [shape: f32[1,50], index: 4, kind: input, shape index: {}]
  %s5 = inlined_call_operand.hbm [shape: f32[2,1,50], index: 5, kind: output, shape index: {}]
  %s6 = sld [smem:[#allocation0]]
  $region53: #{hubert_dense_forward.1} parent=0
    _
  %s8 = ssub.s32 1, %s6
  %s9 = scalar_select 0, %s8, %s6
  %10 = sst [smem:[#allocation2]] %s2
  $region1: #{hubert_dense_forward.1} parent=0
    #allocation3 [shape = 'u8[1024]{0}', space=vmem, size = 0x400, scoped, tag = 'output window, operand 0']
    #allocation4 [shape = 's32[2]{0}', space=sflag, size = 0x8, scoped, tag = 'scoped memory for hubert_dense_forward.1']
    %11 = vsyncpa [#allocation4], 0
    %s12 = scalar_lea.sflag [#allocation4], 1
    %13 = vsyncpa %s12, 0
    loop: start=0, step=1, limit=4
    $region2: #{hubert_dense_forward.1} parent=1 // loop_pre_header
      _
    $region3: #{hubert_dense_forward.1} parent=1 // loop_header
      %s15 = sphi 0, %s19
      %p16 = scmp.ge.s32.totalorder %s15, 4
      %s25 = sphi 0, %s27
      %s28 = sphi 0, %s25
      %s29 = sphi 0, %s28
      %s45 = sphi 0, %s29
      %s49 = sphi 0, %s49
      %s51 = sphi 0, %s49
      %s52 = sphi 0, %s51
      %s66 = sphi 0, %s52
      %s70 = sphi 0, %s70
      %s72 = sphi 0, %s70
      %s73 = sphi 0, %s72
      %s87 = sphi 0, %s73
      %s91 = sphi 0, %s91
      %s93 = sphi 0, %s91
      %s94 = sphi 0, %s93
      %s108 = sphi 0, %s94
      %s112 = sphi 0, %s112
      %s114 = sphi 0, %s112
      %s115 = sphi 0, %s114
      %s129 = sphi 0, %s115
      %s135 = sphi 0, %s137
      %s138 = sphi 0, %s135
      %s139 = sphi 0, %s138
      %s155 = sphi 0, %s139
    $region4: #{hubert_dense_forward.1} parent=1 // loop_header_branch
      %18 = sbr.rel (%p16) target = $region8
    $region5: #{hubert_dense_forward.1} parent=1 // loop_body
      %s20 = ssub.s32 %s15, 1
      %s21 = ssub.s32 %s15, 2
      %s22 = sadd.s32 %s15, 1
      %s23 = ssub.s32 %s15, %s22
      %p24 = scmp.eq.s32.totalorder %s23, 0
      %s26 = sadd.s32 %s25, 1
      %s27 = scalar_select %p24, %s25, %s26
      %p30 = pneg %p24
      %p31 = scmp.eq.s32.totalorder %s15, 1
      %p32 = por %p30, %p31
      %p33 = scmp.ne.s32.totalorder %s25, %s28
      %p34 = scmp.eq.s32.totalorder %s15, 0
      %p35 = por %p33, %p34
      %p36 = scmp.ne.s32.totalorder %s25, %s28
      %p37 = scmp.eq.s32.totalorder %s20, 1
      %p38 = por %p36, %p37
      %p39 = scmp.ne.s32.totalorder %s28, %s29
      %p40 = scmp.eq.s32.totalorder %s20, 0
      %p41 = por %p39, %p40
      %p42 = scmp.ne.s32.totalorder %s28, %s29
      %p43 = scmp.eq.s32.totalorder %s21, 1
      %p44 = por %p42, %p43
      %p46 = scmp.ne.s32.totalorder %s29, %s45
      %p47 = scmp.eq.s32.totalorder %s21, 0
      %p48 = por %p46, %p47
      %s50 = sadd.s32 %s49, 1
      %p53 = scmp.eq.s32.totalorder %s15, 1
      %p54 = scmp.ne.s32.totalorder %s49, %s51
      %p55 = scmp.eq.s32.totalorder %s15, 0
      %p56 = por %p54, %p55
      %p57 = scmp.ne.s32.totalorder %s49, %s51
      %p58 = scmp.eq.s32.totalorder %s20, 1
      %p59 = por %p57, %p58
      %p60 = scmp.ne.s32.totalorder %s51, %s52
      %p61 = scmp.eq.s32.totalorder %s20, 0
      %p62 = por %p60, %p61
      %p63 = scmp.ne.s32.totalorder %s51, %s52
      %p64 = scmp.eq.s32.totalorder %s21, 1
      %p65 = por %p63, %p64
      %p67 = scmp.ne.s32.totalorder %s52, %s66
      %p68 = scmp.eq.s32.totalorder %s21, 0
      %p69 = por %p67, %p68
      %s71 = sadd.s32 %s70, 1
      %p74 = scmp.eq.s32.totalorder %s15, 1
      %p75 = scmp.ne.s32.totalorder %s70, %s72
      %p76 = scmp.eq.s32.totalorder %s15, 0
      %p77 = por %p75, %p76
      %p78 = scmp.ne.s32.totalorder %s70, %s72
      %p79 = scmp.eq.s32.totalorder %s20, 1
      %p80 = por %p78, %p79
      %p81 = scmp.ne.s32.totalorder %s72, %s73
      %p82 = scmp.eq.s32.totalorder %s20, 0
      %p83 = por %p81, %p82
      %p84 = scmp.ne.s32.totalorder %s72, %s73
      %p85 = scmp.eq.s32.totalorder %s21, 1
      %p86 = por %p84, %p85
      %p88 = scmp.ne.s32.totalorder %s73, %s87
      %p89 = scmp.eq.s32.totalorder %s21, 0
      %p90 = por %p88, %p89
      %s92 = sadd.s32 %s91, 1
      %p95 = scmp.eq.s32.totalorder %s15, 1
      %p96 = scmp.ne.s32.totalorder %s91, %s93
      %p97 = scmp.eq.s32.totalorder %s15, 0
      %p98 = por %p96, %p97
      %p99 = scmp.ne.s32.totalorder %s91, %s93
      %p100 = scmp.eq.s32.totalorder %s20, 1
      %p101 = por %p99, %p100
      %p102 = scmp.ne.s32.totalorder %s93, %s94
      %p103 = scmp.eq.s32.totalorder %s20, 0
      %p104 = por %p102, %p103
      %p105 = scmp.ne.s32.totalorder %s93, %s94
      %p106 = scmp.eq.s32.totalorder %s21, 1
      %p107 = por %p105, %p106
      %p109 = scmp.ne.s32.totalorder %s94, %s108
      %p110 = scmp.eq.s32.totalorder %s21, 0
      %p111 = por %p109, %p110
      %s113 = sadd.s32 %s112, 1
      %p116 = scmp.eq.s32.totalorder %s15, 1
      %p117 = scmp.ne.s32.totalorder %s112, %s114
      %p118 = scmp.eq.s32.totalorder %s15, 0
      %p119 = por %p117, %p118
      %p120 = scmp.ne.s32.totalorder %s112, %s114
      %p121 = scmp.eq.s32.totalorder %s20, 1
      %p122 = por %p120, %p121
      %p123 = scmp.ne.s32.totalorder %s114, %s115
      %p124 = scmp.eq.s32.totalorder %s20, 0
      %p125 = por %p123, %p124
      %p126 = scmp.ne.s32.totalorder %s114, %s115
      %p127 = scmp.eq.s32.totalorder %s21, 1
      %p128 = por %p126, %p127
      %p130 = scmp.ne.s32.totalorder %s115, %s129
      %p131 = scmp.eq.s32.totalorder %s21, 0
      %p132 = por %p130, %p131
      %s133 = ssub.s32 %s15, %s22
      %p134 = scmp.eq.s32.totalorder %s133, 0
      %s136 = sadd.s32 %s135, 1
      %s137 = scalar_select %p134, %s135, %s136
      %p140 = pneg %p134
      %p141 = scmp.eq.s32.totalorder %s15, 1
      %p142 = por %p140, %p141
      %p143 = scmp.ne.s32.totalorder %s135, %s138
      %p144 = scmp.eq.s32.totalorder %s15, 0
      %p145 = por %p143, %p144
      %p146 = scmp.ne.s32.totalorder %s135, %s138
      %p147 = scmp.eq.s32.totalorder %s20, 1
      %p148 = por %p146, %p147
      %p149 = scmp.ne.s32.totalorder %s138, %s139
      %p150 = scmp.eq.s32.totalorder %s20, 0
      %p151 = por %p149, %p150
      %p152 = scmp.ne.s32.totalorder %s138, %s139
      %p153 = scmp.eq.s32.totalorder %s21, 1
      %p154 = por %p152, %p153
      %p156 = scmp.ne.s32.totalorder %s139, %s155
      %p157 = scmp.eq.s32.totalorder %s21, 0
      %p158 = por %p156, %p157
      %p159 = scmp.le.s32.totalorder 1, %s15
      %p160 = scmp.lt.s32.totalorder %s15, 3
      %p161 = pnand %p159, %p160
      %p162 = pneg %p161
      // Predicated region
      $region9: #{hubert_dense_forward.1} parent=5 // pred_check
        _
      $region10: #{hubert_dense_forward.1} parent=5 // pred_check_branch
        %164 = sbr.rel (%p161) target = $region12
      $region11: #{hubert_dense_forward.1} parent=5 // pred_region
        %s165 = ssub.s32 %s15, 1
        // Predicated region
        $region13: #{hubert_dense_forward.1} parent=11 // pred_check
          %p166 = pneg %p62
        $region14: #{hubert_dense_forward.1} parent=11 // pred_check_branch
          %168 = sbr.rel (%p166) target = $region16
        $region15: #{hubert_dense_forward.1} parent=11 // pred_region
          _
        $region16: #{hubert_dense_forward.1} parent=11 // pred_fallthru
          _
        // Predicated region
        $region17: #{hubert_dense_forward.1} parent=11 // pred_check
          %p169 = pneg %p83
        $region18: #{hubert_dense_forward.1} parent=11 // pred_check_branch
          %171 = sbr.rel (%p169) target = $region20
        $region19: #{hubert_dense_forward.1} parent=11 // pred_region
          _
        $region20: #{hubert_dense_forward.1} parent=11 // pred_fallthru
          _
        // Predicated region
        $region21: #{hubert_dense_forward.1} parent=11 // pred_check
          %p172 = pneg %p104
        $region22: #{hubert_dense_forward.1} parent=11 // pred_check_branch
          %174 = sbr.rel (%p172) target = $region24
        $region23: #{hubert_dense_forward.1} parent=11 // pred_region
          _
        $region24: #{hubert_dense_forward.1} parent=11 // pred_fallthru
          _
        // Predicated region
        $region25: #{hubert_dense_forward.1} parent=11 // pred_check
          %p175 = pneg %p125
        $region26: #{hubert_dense_forward.1} parent=11 // pred_check_branch
          %177 = sbr.rel (%p175) target = $region28
        $region27: #{hubert_dense_forward.1} parent=11 // pred_region
          _
        $region28: #{hubert_dense_forward.1} parent=11 // pred_fallthru
          _
      $region12: #{hubert_dense_forward.1} parent=5 // pred_fallthru
        _
      %p178 = scmp.lt.s32.totalorder %s15, 2
      // Predicated region
      $region29: #{hubert_dense_forward.1} parent=5 // pred_check
        %p179 = pneg %p178
      $region30: #{hubert_dense_forward.1} parent=5 // pred_check_branch
        %181 = sbr.rel (%p179) target = $region32
      $region31: #{hubert_dense_forward.1} parent=5 // pred_region
        // Predicated region
        $region33: #{hubert_dense_forward.1} parent=31 // pred_check
          %p182 = pneg %p35
        $region34: #{hubert_dense_forward.1} parent=31 // pred_check_branch
          %184 = sbr.rel (%p182) target = $region36
        $region35: #{hubert_dense_forward.1} parent=31 // pred_region
          %p185 = scmp.lt.s32.totalorder %s15, 1
          %s186 = scalar_select %p185, %s15, 1
          %s187 = smul.addr %s186, 80
          %s188 = smul.addr %s187, 8
          %s189 = scalar_lea.vmem %s0, %s188
        $region36: #{hubert_dense_forward.1} parent=31 // pred_fallthru
          _
      $region32: #{hubert_dense_forward.1} parent=5 // pred_fallthru
        _
      %p190 = scmp.le.s32.totalorder 1, %s15
      %p191 = scmp.lt.s32.totalorder %s15, 3
      %p192 = pnand %p190, %p191
      %p193 = pneg %p192
      // Predicated region
      $region37: #{hubert_dense_forward.1} parent=5 // pred_check
        _
      $region38: #{hubert_dense_forward.1} parent=5 // pred_check_branch
        %195 = sbr.rel (%p192) target = $region40
      $region39: #{hubert_dense_forward.1} parent=5 // pred_region
        %s196 = ssub.s32 %s15, 1
        %p197 = scmp.lt.s32.totalorder %s20, 1
        %s198 = scalar_select %p197, %s20, 1
        %s199 = smul.addr %s198, 80
        %s200 = smul.addr %s199, 8
        %s201 = scalar_lea.vmem %s0, %s200
        %p202 = pneg %p41
        %p203 = pneg %p38
        %p204 = pneg %p62
        %p205 = pneg %p59
        %p206 = pneg %p83
        %p207 = pneg %p80
        %p208 = pneg %p104
        %p209 = pneg %p101
        %p210 = pneg %p125
        %p211 = pneg %p122
        %p212 = pneg %p151
        %p213 = pneg %p148
        %s214 = sand.u32 %s138, 1
        %s215 = scalar_lea.sflag [#allocation4], %s214
        %s216 = sand.u32 %s138, 1
        %s217 = scalar_lea.vmem [#allocation3], %s216
        %p218 = scmp.lt.s32.totalorder %s20, 1
        %s219 = scalar_select %p218, %s20, 1
        %s220 = smul.addr %s219, 80
        %s221 = smul.addr %s220, 8
        %s222 = scalar_lea.vmem %s0, %s221
        %v223 = vld [vmem:[%s222] sm:$0xff]
        %v224 = vld [vmem:[%s222 + $0x8] sm:$0xff]
        %v225 = vld [vmem:[%s222 + $0x10] sm:$0xff]
        %v226 = vld [vmem:[%s222 + $0x18] sm:$0xff]
        %v227 = vld [vmem:[%s222 + $0x20] sm:$0xff]
        %v228 = vld [vmem:[%s222 + $0x28] sm:$0xff]
        %v229 = vld [vmem:[%s222 + $0x30] sm:$0xff]
        %v230 = vld [vmem:[%s222 + $0x38] sm:$0xff]
        %v231 = vld [vmem:[%s222 + $0x40] sm:$0xff]
        %v232 = vld [vmem:[%s222 + $0x48] sm:$0xff]
        %v233 = vld [vmem:[%s222 + $0x50] sm:$0xff]
        %v234 = vld [vmem:[%s222 + $0x58] sm:$0xff]
        %v235 = vld [vmem:[%s222 + $0x60] sm:$0xff]
        %v236 = vld [vmem:[%s222 + $0x68] sm:$0xff]
        %v237 = vld [vmem:[%s222 + $0x70] sm:$0xff]
        %v238 = vld [vmem:[%s222 + $0x78] sm:$0xff]
        %v239 = vld [vmem:[%s222 + $0x80] sm:$0xff]
        %v240 = vld [vmem:[%s222 + $0x88] sm:$0xff]
        %v241 = vld [vmem:[%s222 + $0x90] sm:$0xff]
        %v242 = vld [vmem:[%s222 + $0x98] sm:$0xff]
        %v243 = vld [vmem:[%s222 + $0xa0] sm:$0xff]
        %v244 = vld [vmem:[%s222 + $0xa8] sm:$0xff]
        %v245 = vld [vmem:[%s222 + $0xb0] sm:$0xff]
        %v246 = vld [vmem:[%s222 + $0xb8] sm:$0xff]
        %v247 = vld [vmem:[%s222 + $0xc0] sm:$0xff]
        %v248 = vld [vmem:[%s222 + $0xc8] sm:$0xff]
        %v249 = vld [vmem:[%s222 + $0xd0] sm:$0xff]
        %v250 = vld [vmem:[%s222 + $0xd8] sm:$0xff]
        %v251 = vld [vmem:[%s222 + $0xe0] sm:$0xff]
        %v252 = vld [vmem:[%s222 + $0xe8] sm:$0xff]
        %v253 = vld [vmem:[%s222 + $0xf0] sm:$0xff]
        %v254 = vld [vmem:[%s222 + $0xf8] sm:$0xff]
        %v255 = vld [vmem:[%s222 + $0x100] sm:$0xff]
        %v256 = vld [vmem:[%s222 + $0x108] sm:$0xff]
        %v257 = vld [vmem:[%s222 + $0x110] sm:$0xff]
        %v258 = vld [vmem:[%s222 + $0x118] sm:$0xff]
        %v259 = vld [vmem:[%s222 + $0x120] sm:$0xff]
        %v260 = vld [vmem:[%s222 + $0x128] sm:$0xff]
        %v261 = vld [vmem:[%s222 + $0x130] sm:$0xff]
        %v262 = vld [vmem:[%s222 + $0x138] sm:$0xff]
        %v263 = vld [vmem:[%s222 + $0x140] sm:$0xff]
        %v264 = vld [vmem:[%s222 + $0x148] sm:$0xff]
        %v265 = vld [vmem:[%s222 + $0x150] sm:$0xff]
        %v266 = vld [vmem:[%s222 + $0x158] sm:$0xff]
        %v267 = vld [vmem:[%s222 + $0x160] sm:$0xff]
        %v268 = vld [vmem:[%s222 + $0x168] sm:$0xff]
        %v269 = vld [vmem:[%s222 + $0x170] sm:$0xff]
        %v270 = vld [vmem:[%s222 + $0x178] sm:$0xff]
        %v271 = vld [vmem:[%s222 + $0x180] sm:$0xff]
        %v272 = vld [vmem:[%s222 + $0x188] sm:$0xff]
        %v273 = vld [vmem:[%s222 + $0x190] sm:$0xff]
        %v274 = vld [vmem:[%s222 + $0x198] sm:$0xff]
        %v275 = vld [vmem:[%s222 + $0x1a0] sm:$0xff]
        %v276 = vld [vmem:[%s222 + $0x1a8] sm:$0xff]
        %v277 = vld [vmem:[%s222 + $0x1b0] sm:$0xff]
        %v278 = vld [vmem:[%s222 + $0x1b8] sm:$0xff]
        %v279 = vld [vmem:[%s222 + $0x1c0] sm:$0xff]
        %v280 = vld [vmem:[%s222 + $0x1c8] sm:$0xff]
        %v281 = vld [vmem:[%s222 + $0x1d0] sm:$0xff]
        %v282 = vld [vmem:[%s222 + $0x1d8] sm:$0xff]
        %v283 = vld [vmem:[%s222 + $0x1e0] sm:$0xff]
        %v284 = vld [vmem:[%s222 + $0x1e8] sm:$0xff]
        %v285 = vld [vmem:[%s222 + $0x1f0] sm:$0xff]
        %v286 = vld [vmem:[%s222 + $0x1f8] sm:$0xff]
        %v287 = vld [vmem:[%s222 + $0x200] sm:$0xff]
        %v288 = vld [vmem:[%s222 + $0x208] sm:$0xff]
        %v289 = vld [vmem:[%s222 + $0x210] sm:$0xff]
        %v290 = vld [vmem:[%s222 + $0x218] sm:$0xff]
        %v291 = vld [vmem:[%s222 + $0x220] sm:$0xff]
        %v292 = vld [vmem:[%s222 + $0x228] sm:$0xff]
        %v293 = vld [vmem:[%s222 + $0x230] sm:$0xff]
        %v294 = vld [vmem:[%s222 + $0x238] sm:$0xff]
        %v295 = vld [vmem:[%s222 + $0x240] sm:$0xf]
        %v296 = vld [vmem:[%s222 + $0x248] sm:$0xf]
        %v297 = vld [vmem:[%s222 + $0x250] sm:$0xf]
        %v298 = vld [vmem:[%s222 + $0x258] sm:$0xf]
        %v299 = vld [vmem:[%s222 + $0x260] sm:$0xf]
        %v300 = vld [vmem:[%s222 + $0x268] sm:$0xf]
        %v301 = vld [vmem:[%s222 + $0x270] sm:$0xf]
        %v302 = vld [vmem:[%s222 + $0x278] sm:$0xf]
        %v303 = vld [vmem:[%s1] sm:$0x1f]
        %v304 = vld [vmem:[%s1 + $0x8] sm:$0x1f]
        %v305 = vld [vmem:[%s1 + $0x10] sm:$0x1f]
        %v306 = vld [vmem:[%s1 + $0x18] sm:$0x1f]
        %v307 = vld [vmem:[%s1 + $0x20] sm:$0x1f]
        %v308 = vld [vmem:[%s1 + $0x28] sm:$0x1f]
        %v309 = vld [vmem:[%s1 + $0x30] sm:$0x1f]
        %v310 = vld [vmem:[%s1 + $0x38] sm:$0x1f]
        %vm311 = vcmask 769024
        %v313 = vsel %vm311, %v310, 0
        %v316 = vsel %vm311, %v230, 0
        %v319 = vsel %vm311, %v238, 0
        %v322 = vsel %vm311, %v246, 0
        %v325 = vsel %vm311, %v254, 0
        %v328 = vsel %vm311, %v262, 0
        %v331 = vsel %vm311, %v270, 0
        %v334 = vsel %vm311, %v278, 0
        %v337 = vsel %vm311, %v286, 0
        %v340 = vsel %vm311, %v294, 0
        %v343 = vsel %vm311, %v302, 0
        %345 = vmatprep.subr.mxu0 0.0
        %346 = vmatpush1.xpose.msra.mxu0 0.0
        %347 = vmatprep.subr.mxu0 0.0
        %348 = vmatpush1.xpose.msra.mxu0 0.0
        %349 = vmatprep.subr.mxu0 0.0
        %350 = vmatpush1.xpose.msra.mxu0 0.0
        %351 = vmatprep.subr.mxu0 0.0
        %352 = vmatpush1.xpose.msra.mxu0 0.0
        %353 = vmatprep.subr.mxu0 0.0
        %354 = vmatpush1.xpose.msra.mxu0 0.0
        %355 = vmatprep.subr.mxu0 0.0
        %356 = vmatpush1.xpose.msra.mxu0 0.0
        %357 = vmatprep.subr.mxu0 %v296
        %358 = vmatpush1.xpose.msra.mxu0 %v295
        %359 = vmatprep.subr.mxu0 %v288
        %360 = vmatpush1.xpose.msra.mxu0 %v287
        %361 = vmatprep.subr.mxu0 %v280
        %362 = vmatpush1.xpose.msra.mxu0 %v279
        %363 = vmatprep.subr.mxu0 %v272
        %364 = vmatpush1.xpose.msra.mxu0 %v271
        %365 = vmatprep.subr.mxu0 %v264
        %366 = vmatpush1.xpose.msra.mxu0 %v263
        %367 = vmatprep.subr.mxu0 %v256
        %368 = vmatpush1.xpose.msra.mxu0 %v255
        %369 = vmatprep.subr.mxu0 %v248
        %370 = vmatpush1.xpose.msra.mxu0 %v247
        %371 = vmatprep.subr.mxu0 %v240
        %372 = vmatpush1.xpose.msra.mxu0 %v239
        %373 = vmatprep.subr.mxu0 %v232
        %374 = vmatpush1.xpose.msra.mxu0 %v231
        %375 = vmatprep.subr.mxu0 %v224
        %376 = vmatpush1.xpose.msra.mxu0 %v223
        %377 = vmatprep.subr.mxu0 0.0
        %378 = vmatpush2.xpose.msra.mxu0 0.0
        %379 = vmatprep.subr.mxu0 0.0
        %380 = vmatpush2.xpose.msra.mxu0 0.0
        %381 = vmatprep.subr.mxu0 0.0
        %382 = vmatpush2.xpose.msra.mxu0 0.0
        %383 = vmatprep.subr.mxu0 0.0
        %384 = vmatpush2.xpose.msra.mxu0 0.0
        %385 = vmatprep.subr.mxu0 0.0
        %386 = vmatpush2.xpose.msra.mxu0 0.0
        %387 = vmatprep.subr.mxu0 0.0
        %388 = vmatpush2.xpose.msra.mxu0 0.0
        %389 = vmatprep.subr.mxu0 0.0
        %390 = vmatpush2.xpose.msra.mxu0 0.0
        %391 = vmatprep.subr.mxu0 0.0
        %392 = vmatpush2.xpose.msra.mxu0 0.0
        %393 = vmatprep.subr.mxu0 0.0
        %394 = vmatpush2.xpose.msra.mxu0 0.0
        %395 = vmatprep.subr.mxu0 0.0
        %396 = vmatpush2.xpose.msra.mxu0 0.0
        %397 = vmatprep.subr.mxu0 0.0
        %398 = vmatpush2.xpose.msra.mxu0 0.0
        %399 = vmatprep.subr.mxu0 0.0
        %400 = vmatpush2.xpose.msra.mxu0 0.0
        %401 = vmatprep.subr.mxu0 0.0
        %402 = vmatpush2.xpose.msra.mxu0 0.0
        %403 = vmatprep.subr.mxu0 0.0
        %404 = vmatpush2.xpose.msra.mxu0 0.0
        %405 = vmatprep.subr.mxu0 0.0
        %406 = vmatpush2.xpose.msra.mxu0 0.0
        %407 = vmatprep.subr.mxu0 0.0
        %408 = vmatpush2.xpose.msra.mxu0 0.0
        %409 = vmatprep.mubr.f32.mxu0 %v304
        %410 = vmatmul.mubr.f32.gmra.mxu0 %v303
        %v411 = vpop.f32.mrf.mxu0
        %v412 = vadd.f32 0.0, %v411
        %v413 = vpop.f32.mrf.mxu0
        %414 = vdwg.mxu0
        %415 = vmatprep.subr.mxu0 0.0
        %416 = vmatpush1.xpose.msra.mxu0 0.0
        %417 = vmatprep.subr.mxu0 0.0
        %418 = vmatpush1.xpose.msra.mxu0 0.0
        %419 = vmatprep.subr.mxu0 0.0
        %420 = vmatpush1.xpose.msra.mxu0 0.0
        %421 = vmatprep.subr.mxu0 0.0
        %422 = vmatpush1.xpose.msra.mxu0 0.0
        %423 = vmatprep.subr.mxu0 0.0
        %424 = vmatpush1.xpose.msra.mxu0 0.0
        %425 = vmatprep.subr.mxu0 0.0
        %426 = vmatpush1.xpose.msra.mxu0 0.0
        %427 = vmatprep.subr.mxu0 %v298
        %428 = vmatpush1.xpose.msra.mxu0 %v297
        %429 = vmatprep.subr.mxu0 %v290
        %430 = vmatpush1.xpose.msra.mxu0 %v289
        %431 = vmatprep.subr.mxu0 %v282
        %432 = vmatpush1.xpose.msra.mxu0 %v281
        %433 = vmatprep.subr.mxu0 %v274
        %434 = vmatpush1.xpose.msra.mxu0 %v273
        %435 = vmatprep.subr.mxu0 %v266
        %436 = vmatpush1.xpose.msra.mxu0 %v265
        %437 = vmatprep.subr.mxu0 %v258
        %438 = vmatpush1.xpose.msra.mxu0 %v257
        %439 = vmatprep.subr.mxu0 %v250
        %440 = vmatpush1.xpose.msra.mxu0 %v249
        %441 = vmatprep.subr.mxu0 %v242
        %442 = vmatpush1.xpose.msra.mxu0 %v241
        %443 = vmatprep.subr.mxu0 %v234
        %444 = vmatpush1.xpose.msra.mxu0 %v233
        %445 = vmatprep.subr.mxu0 %v226
        %446 = vmatpush1.xpose.msra.mxu0 %v225
        %447 = vmatprep.subr.mxu0 0.0
        %448 = vmatpush2.xpose.msra.mxu0 0.0
        %449 = vmatprep.subr.mxu0 0.0
        %450 = vmatpush2.xpose.msra.mxu0 0.0
        %451 = vmatprep.subr.mxu0 0.0
        %452 = vmatpush2.xpose.msra.mxu0 0.0
        %453 = vmatprep.subr.mxu0 0.0
        %454 = vmatpush2.xpose.msra.mxu0 0.0
        %455 = vmatprep.subr.mxu0 0.0
        %456 = vmatpush2.xpose.msra.mxu0 0.0
        %457 = vmatprep.subr.mxu0 0.0
        %458 = vmatpush2.xpose.msra.mxu0 0.0
        %459 = vmatprep.subr.mxu0 0.0
        %460 = vmatpush2.xpose.msra.mxu0 0.0
        %461 = vmatprep.subr.mxu0 0.0
        %462 = vmatpush2.xpose.msra.mxu0 0.0
        %463 = vmatprep.subr.mxu0 0.0
        %464 = vmatpush2.xpose.msra.mxu0 0.0
        %465 = vmatprep.subr.mxu0 0.0
        %466 = vmatpush2.xpose.msra.mxu0 0.0
        %467 = vmatprep.subr.mxu0 0.0
        %468 = vmatpush2.xpose.msra.mxu0 0.0
        %469 = vmatprep.subr.mxu0 0.0
        %470 = vmatpush2.xpose.msra.mxu0 0.0
        %471 = vmatprep.subr.mxu0 0.0
        %472 = vmatpush2.xpose.msra.mxu0 0.0
        %473 = vmatprep.subr.mxu0 0.0
        %474 = vmatpush2.xpose.msra.mxu0 0.0
        %475 = vmatprep.subr.mxu0 0.0
        %476 = vmatpush2.xpose.msra.mxu0 0.0
        %477 = vmatprep.subr.mxu0 0.0
        %478 = vmatpush2.xpose.msra.mxu0 0.0
        %479 = vmatprep.mubr.f32.mxu0 %v306
        %480 = vmatmul.mubr.f32.gmra.mxu0 %v305
        %v481 = vpop.f32.mrf.mxu0
        %v482 = vadd.f32 %v412, %v481
        %v483 = vpop.f32.mrf.mxu0
        %484 = vdwg.mxu0
        %485 = vmatprep.subr.mxu0 0.0
        %486 = vmatpush1.xpose.msra.mxu0 0.0
        %487 = vmatprep.subr.mxu0 0.0
        %488 = vmatpush1.xpose.msra.mxu0 0.0
        %489 = vmatprep.subr.mxu0 0.0
        %490 = vmatpush1.xpose.msra.mxu0 0.0
        %491 = vmatprep.subr.mxu0 0.0
        %492 = vmatpush1.xpose.msra.mxu0 0.0
        %493 = vmatprep.subr.mxu0 0.0
        %494 = vmatpush1.xpose.msra.mxu0 0.0
        %495 = vmatprep.subr.mxu0 0.0
        %496 = vmatpush1.xpose.msra.mxu0 0.0
        %497 = vmatprep.subr.mxu0 %v300
        %498 = vmatpush1.xpose.msra.mxu0 %v299
        %499 = vmatprep.subr.mxu0 %v292
        %500 = vmatpush1.xpose.msra.mxu0 %v291
        %501 = vmatprep.subr.mxu0 %v284
        %502 = vmatpush1.xpose.msra.mxu0 %v283
        %503 = vmatprep.subr.mxu0 %v276
        %504 = vmatpush1.xpose.msra.mxu0 %v275
        %505 = vmatprep.subr.mxu0 %v268
        %506 = vmatpush1.xpose.msra.mxu0 %v267
        %507 = vmatprep.subr.mxu0 %v260
        %508 = vmatpush1.xpose.msra.mxu0 %v259
        %509 = vmatprep.subr.mxu0 %v252
        %510 = vmatpush1.xpose.msra.mxu0 %v251
        %511 = vmatprep.subr.mxu0 %v244
        %512 = vmatpush1.xpose.msra.mxu0 %v243
        %513 = vmatprep.subr.mxu0 %v236
        %514 = vmatpush1.xpose.msra.mxu0 %v235
        %515 = vmatprep.subr.mxu0 %v228
        %516 = vmatpush1.xpose.msra.mxu0 %v227
        %517 = vmatprep.subr.mxu0 0.0
        %518 = vmatpush2.xpose.msra.mxu0 0.0
        %519 = vmatprep.subr.mxu0 0.0
        %520 = vmatpush2.xpose.msra.mxu0 0.0
        %521 = vmatprep.subr.mxu0 0.0
        %522 = vmatpush2.xpose.msra.mxu0 0.0
        %523 = vmatprep.subr.mxu0 0.0
        %524 = vmatpush2.xpose.msra.mxu0 0.0
        %525 = vmatprep.subr.mxu0 0.0
        %526 = vmatpush2.xpose.msra.mxu0 0.0
        %527 = vmatprep.subr.mxu0 0.0
        %528 = vmatpush2.xpose.msra.mxu0 0.0
        %529 = vmatprep.subr.mxu0 0.0
        %530 = vmatpush2.xpose.msra.mxu0 0.0
        %531 = vmatprep.subr.mxu0 0.0
        %532 = vmatpush2.xpose.msra.mxu0 0.0
        %533 = vmatprep.subr.mxu0 0.0
        %534 = vmatpush2.xpose.msra.mxu0 0.0
        %535 = vmatprep.subr.mxu0 0.0
        %536 = vmatpush2.xpose.msra.mxu0 0.0
        %537 = vmatprep.subr.mxu0 0.0
        %538 = vmatpush2.xpose.msra.mxu0 0.0
        %539 = vmatprep.subr.mxu0 0.0
        %540 = vmatpush2.xpose.msra.mxu0 0.0
        %541 = vmatprep.subr.mxu0 0.0
        %542 = vmatpush2.xpose.msra.mxu0 0.0
        %543 = vmatprep.subr.mxu0 0.0
        %544 = vmatpush2.xpose.msra.mxu0 0.0
        %545 = vmatprep.subr.mxu0 0.0
        %546 = vmatpush2.xpose.msra.mxu0 0.0
        %547 = vmatprep.subr.mxu0 0.0
        %548 = vmatpush2.xpose.msra.mxu0 0.0
        %549 = vmatprep.mubr.f32.mxu0 %v308
        %550 = vmatmul.mubr.f32.gmra.mxu0 %v307
        %v551 = vpop.f32.mrf.mxu0
        %v552 = vadd.f32 %v482, %v551
        %v553 = vpop.f32.mrf.mxu0
        %554 = vdwg.mxu0
        %555 = vmatprep.subr.mxu0 0.0
        %556 = vmatpush1.xpose.msra.mxu0 0.0
        %557 = vmatprep.subr.mxu0 0.0
        %558 = vmatpush1.xpose.msra.mxu0 0.0
        %559 = vmatprep.subr.mxu0 0.0
        %560 = vmatpush1.xpose.msra.mxu0 0.0
        %561 = vmatprep.subr.mxu0 0.0
        %562 = vmatpush1.xpose.msra.mxu0 0.0
        %563 = vmatprep.subr.mxu0 0.0
        %564 = vmatpush1.xpose.msra.mxu0 0.0
        %565 = vmatprep.subr.mxu0 0.0
        %566 = vmatpush1.xpose.msra.mxu0 0.0
        %567 = vmatprep.subr.mxu0 %v343
        %568 = vmatpush1.xpose.msra.mxu0 %v301
        %569 = vmatprep.subr.mxu0 %v340
        %570 = vmatpush1.xpose.msra.mxu0 %v293
        %571 = vmatprep.subr.mxu0 %v337
        %572 = vmatpush1.xpose.msra.mxu0 %v285
        %573 = vmatprep.subr.mxu0 %v334
        %574 = vmatpush1.xpose.msra.mxu0 %v277
        %575 = vmatprep.subr.mxu0 %v331
        %576 = vmatpush1.xpose.msra.mxu0 %v269
        %577 = vmatprep.subr.mxu0 %v328
        %578 = vmatpush1.xpose.msra.mxu0 %v261
        %579 = vmatprep.subr.mxu0 %v325
        %580 = vmatpush1.xpose.msra.mxu0 %v253
        %581 = vmatprep.subr.mxu0 %v322
        %582 = vmatpush1.xpose.msra.mxu0 %v245
        %583 = vmatprep.subr.mxu0 %v319
        %584 = vmatpush1.xpose.msra.mxu0 %v237
        %585 = vmatprep.subr.mxu0 %v316
        %586 = vmatpush1.xpose.msra.mxu0 %v229
        %587 = vmatprep.subr.mxu0 0.0
        %588 = vmatpush2.xpose.msra.mxu0 0.0
        %589 = vmatprep.subr.mxu0 0.0
        %590 = vmatpush2.xpose.msra.mxu0 0.0
        %591 = vmatprep.subr.mxu0 0.0
        %592 = vmatpush2.xpose.msra.mxu0 0.0
        %593 = vmatprep.subr.mxu0 0.0
        %594 = vmatpush2.xpose.msra.mxu0 0.0
        %595 = vmatprep.subr.mxu0 0.0
        %596 = vmatpush2.xpose.msra.mxu0 0.0
        %597 = vmatprep.subr.mxu0 0.0
        %598 = vmatpush2.xpose.msra.mxu0 0.0
        %599 = vmatprep.subr.mxu0 0.0
        %600 = vmatpush2.xpose.msra.mxu0 0.0
        %601 = vmatprep.subr.mxu0 0.0
        %602 = vmatpush2.xpose.msra.mxu0 0.0
        %603 = vmatprep.subr.mxu0 0.0
        %604 = vmatpush2.xpose.msra.mxu0 0.0
        %605 = vmatprep.subr.mxu0 0.0
        %606 = vmatpush2.xpose.msra.mxu0 0.0
        %607 = vmatprep.subr.mxu0 0.0
        %608 = vmatpush2.xpose.msra.mxu0 0.0
        %609 = vmatprep.subr.mxu0 0.0
        %610 = vmatpush2.xpose.msra.mxu0 0.0
        %611 = vmatprep.subr.mxu0 0.0
        %612 = vmatpush2.xpose.msra.mxu0 0.0
        %613 = vmatprep.subr.mxu0 0.0
        %614 = vmatpush2.xpose.msra.mxu0 0.0
        %615 = vmatprep.subr.mxu0 0.0
        %616 = vmatpush2.xpose.msra.mxu0 0.0
        %617 = vmatprep.subr.mxu0 0.0
        %618 = vmatpush2.xpose.msra.mxu0 0.0
        %619 = vmatprep.mubr.f32.mxu0 %v313
        %620 = vmatmul.mubr.f32.gmra.mxu0 %v309
        %v621 = vpop.f32.mrf.mxu0
        %v622 = vadd.f32 %v552, %v621
        %v623 = vpop.f32.mrf.mxu0
        %624 = vdwg.mxu0
        %v626 = vrot.slane %v622, 1
        %627 = vrot.lane.b32.xlu0 %v626, 127
        %v628 = vpop.permute.xlu0 %627
        %v630 = vadd.f32 %v622, %v628
        %v631 = vrot.slane %v622, 2
        %632 = vrot.lane.b32.xlu0 %v631, 126
        %v633 = vpop.permute.xlu0 %632
        %v635 = vadd.f32 %v630, %v633
        %v636 = vrot.slane %v622, 3
        %637 = vrot.lane.b32.xlu0 %v636, 125
        %v638 = vpop.permute.xlu0 %637
        %v640 = vadd.f32 %v635, %v638
        %v641 = vrot.slane %v622, 4
        %642 = vrot.lane.b32.xlu0 %v641, 124
        %v643 = vpop.permute.xlu0 %642
        %v645 = vadd.f32 %v640, %v643
        %s646 = sld [smem:[#allocation2]]
        %v647 = vstv %s646
        %v648 = vadd.f32 %v645, %v647
        %v649 = vmax.f32 %v648, 0.0
        %v650 = vld [vmem:[%s3] sm:$0xff]
        %v651 = vld [vmem:[%s3 + $0x8] sm:$0xff]
        %v652 = vld [vmem:[%s3 + $0x10] sm:$0xff]
        %v653 = vld [vmem:[%s3 + $0x18] sm:$0xff]
        %v654 = vld [vmem:[%s3 + $0x20] sm:$0xff]
        %v655 = vld [vmem:[%s3 + $0x28] sm:$0xff]
        %v656 = vld [vmem:[%s3 + $0x30] sm:$0xff]
        %v657 = vld [vmem:[%s3 + $0x38] sm:$0xff]
        %v658 = vld [vmem:[%s3 + $0x40] sm:$0xff]
        %v659 = vld [vmem:[%s4] sm:$0x1]
        %vm660 = vcmask 588800
        %v662 = vsel %vm660, %v649, 0
        %664 = vmatprep.subr.mxu0 0.0
        %665 = vmatpush1.msra.mxu0 0.0
        %666 = vmatprep.subr.mxu0 0.0
        %667 = vmatpush1.msra.mxu0 0.0
        %668 = vmatprep.subr.mxu0 0.0
        %669 = vmatpush1.msra.mxu0 0.0
        %670 = vmatprep.subr.mxu0 0.0
        %671 = vmatpush1.msra.mxu0 0.0
        %672 = vmatprep.subr.mxu0 0.0
        %673 = vmatpush1.msra.mxu0 0.0
        %674 = vmatprep.subr.mxu0 0.0
        %675 = vmatpush1.msra.mxu0 0.0
        %676 = vmatprep.subr.mxu0 0.0
        %677 = vmatpush1.msra.mxu0 0.0
        %678 = vmatprep.subr.mxu0 0.0
        %679 = vmatpush1.msra.mxu0 %v658
        %680 = vmatprep.subr.mxu0 0.0
        %681 = vmatpush1.msra.mxu0 %v657
        %682 = vmatprep.subr.mxu0 0.0
        %683 = vmatpush1.msra.mxu0 %v656
        %684 = vmatprep.subr.mxu0 0.0
        %685 = vmatpush1.msra.mxu0 %v655
        %686 = vmatprep.subr.mxu0 0.0
        %687 = vmatpush1.msra.mxu0 %v654
        %688 = vmatprep.subr.mxu0 0.0
        %689 = vmatpush1.msra.mxu0 %v653
        %690 = vmatprep.subr.mxu0 0.0
        %691 = vmatpush1.msra.mxu0 %v652
        %692 = vmatprep.subr.mxu0 0.0
        %693 = vmatpush1.msra.mxu0 %v651
        %694 = vmatprep.subr.mxu0 0.0
        %695 = vmatpush1.msra.mxu0 %v650
        %696 = vmatprep.subr.mxu0 0.0
        %697 = vmatpush2.msra.mxu0 0.0
        %698 = vmatprep.subr.mxu0 0.0
        %699 = vmatpush2.msra.mxu0 0.0
        %700 = vmatprep.subr.mxu0 0.0
        %701 = vmatpush2.msra.mxu0 0.0
        %702 = vmatprep.subr.mxu0 0.0
        %703 = vmatpush2.msra.mxu0 0.0
        %704 = vmatprep.subr.mxu0 0.0
        %705 = vmatpush2.msra.mxu0 0.0
        %706 = vmatprep.subr.mxu0 0.0
        %707 = vmatpush2.msra.mxu0 0.0
        %708 = vmatprep.subr.mxu0 0.0
        %709 = vmatpush2.msra.mxu0 0.0
        %710 = vmatprep.subr.mxu0 0.0
        %711 = vmatpush2.msra.mxu0 0.0
        %712 = vmatprep.subr.mxu0 0.0
        %713 = vmatpush2.msra.mxu0 0.0
        %714 = vmatprep.subr.mxu0 0.0
        %715 = vmatpush2.msra.mxu0 0.0
        %716 = vmatprep.subr.mxu0 0.0
        %717 = vmatpush2.msra.mxu0 0.0
        %718 = vmatprep.subr.mxu0 0.0
        %719 = vmatpush2.msra.mxu0 0.0
        %720 = vmatprep.subr.mxu0 0.0
        %721 = vmatpush2.msra.mxu0 0.0
        %722 = vmatprep.subr.mxu0 0.0
        %723 = vmatpush2.msra.mxu0 0.0
        %724 = vmatprep.subr.mxu0 0.0
        %725 = vmatpush2.msra.mxu0 0.0
        %726 = vmatprep.subr.mxu0 0.0
        %727 = vmatpush2.msra.mxu0 0.0
        %728 = vmatprep.mubr.f32.mxu0 0.0
        %729 = vmatmul.mubr.f32.gmra.mxu0 %v662
        %v730 = vpop.f32.mrf.mxu0
        %v731 = vadd.f32 %v659, %v730
        %v732 = vpop.f32.mrf.mxu0
        %733 = vdwg.mxu0
        %vm734 = vcmask 401408
        %735 = vst.msk [vmem:[%s217] sm:$0x1] %vm734, %v731
        %s736 = sand.u32 %s138, 1
        %s737 = scalar_lea.sflag [#allocation4], %s736
        %s738 = sand.u32 %s138, 1
        %s739 = scalar_lea.vmem [#allocation3], %s738
        // Predicated region
        $region41: #{hubert_dense_forward.1} parent=39 // pred_check
          %p740 = pneg %p148
        $region42: #{hubert_dense_forward.1} parent=39 // pred_check_branch
          %742 = sbr.rel (%p740) target = $region44
        $region43: #{hubert_dense_forward.1} parent=39 // pred_region
          %s744 = ssub.s32 16, 16
          %745 = vsyncadd %s737, %s744
          %s746 = smul.addr %s20, 16
          %s747 = scalar_lea.hbm %s5, %s746
          %s749 = sshll.u32 %s739, 4
          %s750 = int_to_ptr.vmem [resolvable:$true] %s749
          %752 = dma.vmem_to_hbm [thread:$0]  %s750, 16, %s747, %s737
        $region44: #{hubert_dense_forward.1} parent=39 // pred_fallthru
          _
      $region40: #{hubert_dense_forward.1} parent=5 // pred_fallthru
        _
      %p753 = scmp.le.s32.totalorder 2, %s15
      // Predicated region
      $region45: #{hubert_dense_forward.1} parent=5 // pred_check
        %p754 = pneg %p753
      $region46: #{hubert_dense_forward.1} parent=5 // pred_check_branch
        %756 = sbr.rel (%p754) target = $region48
      $region47: #{hubert_dense_forward.1} parent=5 // pred_region
        %s757 = ssub.s32 %s15, 2
        // Predicated region
        $region49: #{hubert_dense_forward.1} parent=47 // pred_check
          %p758 = pneg %p154
        $region50: #{hubert_dense_forward.1} parent=47 // pred_check_branch
          %760 = sbr.rel (%p758) target = $region52
        $region51: #{hubert_dense_forward.1} parent=47 // pred_region
          %s761 = sand.u32 %s139, 1
          %s762 = scalar_lea.sflag [#allocation4], %s761
          %s763 = sand.u32 %s139, 1
          %s764 = scalar_lea.vmem [#allocation3], %s763
          %765 = dma.done %s762, 16
        $region52: #{hubert_dense_forward.1} parent=47 // pred_fallthru
          _
      $region48: #{hubert_dense_forward.1} parent=5 // pred_fallthru
        _
    $region6: #{hubert_dense_forward.1} parent=1 // loop_footer
      %s19 = sadd.s32 1, %s15
    $region7: #{hubert_dense_forward.1} parent=1 // loop_footer_branch
      %14 = sbr.rel target = $region3
    $region8: #{hubert_dense_forward.1} parent=1 // loop_exit
      _
    %766 = vsyncpa [#allocation4], 1
    %s767 = scalar_lea.sflag [#allocation4], 1
    %768 = vsyncpa %s767, 1

</llo_original>
